<compile_context>
chip_gen: v7x
topology: tpu7x:2x2x1
jax: 0.10.0
libtpu: 0.0.40
codegen_flags: <defaults>
</compile_context>

<pallas_src>
import functools

import jax
import jax.numpy as jnp
from jax.experimental import pallas as pl
from jax.experimental.pallas import tpu as pltpu

_MXU_DTYPE = jnp.bfloat16     # MXU operand dtype (accumulation stays f32)
_ACT_DTYPE = jnp.bfloat16     # HBM dtype of intermediates (Q/K/V proj, ctx, attn)
_MASK_VALUE = -1e30           # finite "minus infinity" for masked positions
_ROW_TILE = 256               # query-row tile (clipped to the sequence length)
_KV_TILE = 512                # key tile for the flash (no-probs) attention path


def _row_tile(n):
    return n if n <= _ROW_TILE else _ROW_TILE


def _kv_tile(n):
    return n if n <= _KV_TILE else _KV_TILE


def _vmem_limit_bytes():
    # ~3/4 of physical VMEM, capped at 96 MiB: 96 MiB on 128 MiB chips
    # (v5e/v6e), 48 MiB on v7x's 64 MiB.  Falls back to 64 MiB if the query
    # API is unavailable.
    try:
        cap = int(getattr(pltpu.get_tpu_info(), "vmem_capacity_bytes", 0))
    except Exception:  # pragma: no cover - defensive
        cap = 0
    if cap <= 0:
        return 64 * 1024 * 1024
    return min(96 * 1024 * 1024, (cap * 3) // 4)


# ---------------------------------------------------------------------------
# Kernel 1: fused-head linear projection
#   x (B, L, d_in) @ W (d_in, H*d_h) + b  ->  (B, L, H*d_h), lane-dense output.
# ---------------------------------------------------------------------------
def _proj_kernel(x_ref, w_ref, b_ref, o_ref):
    # TODO(synk): accept bf16 activations directly if the caller provides them.
    x = x_ref[0].astype(_MXU_DTYPE)                          # (TL, d_in)
    y = jnp.dot(x, w_ref[...], preferred_element_type=jnp.float32)
    y = y + b_ref[...].astype(jnp.float32)                   # (1, H*dh) bcast
    o_ref[0] = y.astype(o_ref.dtype)


def fused_head_projection(x, w, b):
    sz_b, seq, d_in = x.shape
    d_out = w.shape[1]
    tl = _row_tile(seq)
    grid = (sz_b, pl.cdiv(seq, tl))
    return pl.pallas_call(
        _proj_kernel,
        out_shape=jax.ShapeDtypeStruct((sz_b, seq, d_out), _ACT_DTYPE),
        grid=grid,
        in_specs=[
            pl.BlockSpec((1, tl, d_in), lambda b_, t: (b_, t, 0)),
            pl.BlockSpec((d_in, d_out), lambda b_, t: (0, 0)),
            pl.BlockSpec((1, d_out), lambda b_, t: (0, 0)),
        ],
        out_specs=pl.BlockSpec((1, tl, d_out), lambda b_, t: (b_, t, 0)),
        compiler_params=pltpu.CompilerParams(
            dimension_semantics=("parallel", "parallel"),
            vmem_limit_bytes=_vmem_limit_bytes()),
    )(x, w, b)


# ---------------------------------------------------------------------------
# Kernel 2a: attention, single K pass, emits probabilities (bf16).
# Grid (B, Lq/tq); all heads processed per step via static per-head slices of
# the lane-dense (TQ, H*d) tiles.  ctx is written as one lane-dense
# (TQ, H*d_v) block.  TODO(synk): attn_dropout not applied (eval mode).
# ---------------------------------------------------------------------------
def _attn_probs_kernel(*refs, n_head, d_k, d_v, apply_mask):
    i = 0
    mb_ref = None
    if apply_mask:
        mb_ref = refs[i]
        i += 1
    q_ref, k_ref, v_ref = refs[i:i + 3]
    i += 3
    o_ref, a_ref = refs[i], refs[i + 1]

    q = q_ref[0]                                             # (TQ, H*dk) bf16
    k = k_ref[0]                                             # (Lk, H*dk) bf16
    v = v_ref[0]                                             # (Lk, H*dv) bf16
    mb = mb_ref[0].astype(jnp.float32) if apply_mask else None

    parts = []
    for h in range(n_head):
        q_h = q[:, h * d_k:(h + 1) * d_k]
        k_h = k[:, h * d_k:(h + 1) * d_k]
        v_h = v[:, h * d_v:(h + 1) * d_v]
        # Q_h K_h^T (1/temperature already folded into the Q weights).
        s = jax.lax.dot_general(q_h, k_h, (((1,), (1,)), ((), ())),
                                preferred_element_type=jnp.float32)  # (TQ, Lk)
        if apply_mask:
            s = s + mb                                       # additive -1e30 bias
        mx = jnp.max(s, axis=-1, keepdims=True)
        e = jnp.exp(s - mx)
        denom = jnp.sum(e, axis=-1, keepdims=True)
        attn = e * pl.reciprocal(denom, approx=True)
        ctx_h = jnp.dot(attn.astype(_MXU_DTYPE), v_h,
                        preferred_element_type=jnp.float32)  # (TQ, dv)
        parts.append(ctx_h)
        a_ref[h, 0, :, :] = attn.astype(a_ref.dtype)
    o_ref[0] = jnp.concatenate(parts, axis=-1).astype(o_ref.dtype)


def attention_with_probs(q, k, v, mask_bias, n_head, d_k, d_v):
    sz_b, len_q, _ = q.shape
    _, len_k, _ = k.shape
    tq = _row_tile(len_q)
    grid = (sz_b, pl.cdiv(len_q, tq))
    apply_mask = mask_bias is not None

    kernel = functools.partial(_attn_probs_kernel, n_head=n_head, d_k=d_k,
                               d_v=d_v, apply_mask=apply_mask)
    inputs, in_specs = [], []
    if apply_mask:
        inputs.append(mask_bias)
        in_specs.append(pl.BlockSpec((1, tq, len_k), lambda b_, t: (b_, t, 0)))
    inputs += [q, k, v]
    in_specs += [
        pl.BlockSpec((1, tq, n_head * d_k), lambda b_, t: (b_, t, 0)),
        pl.BlockSpec((1, len_k, n_head * d_k), lambda b_, t: (b_, 0, 0)),
        pl.BlockSpec((1, len_k, n_head * d_v), lambda b_, t: (b_, 0, 0)),
    ]
    out_shape = (
        jax.ShapeDtypeStruct((sz_b, len_q, n_head * d_v), _ACT_DTYPE),
        jax.ShapeDtypeStruct((n_head, sz_b, len_q, len_k), _ACT_DTYPE),
    )
    out_specs = (
        pl.BlockSpec((1, tq, n_head * d_v), lambda b_, t: (b_, t, 0)),
        pl.BlockSpec((n_head, 1, tq, len_k), lambda b_, t: (0, b_, t, 0)),
    )
    ctx, attn = pl.pallas_call(
        kernel, out_shape=out_shape, grid=grid,
        in_specs=in_specs, out_specs=out_specs,
        compiler_params=pltpu.CompilerParams(
            dimension_semantics=("parallel", "parallel"),
            vmem_limit_bytes=_vmem_limit_bytes()),
    )(*inputs)
    return ctx, attn


# ---------------------------------------------------------------------------
# Kernel 2b: attention, flash-style K tiling (no probability output).
# Grid (B, Lq/tq, Lk/tk) with the K axis "arbitrary"; running max / denom /
# accumulator live in VMEM scratch, so K/V residency is one K tile.
# ---------------------------------------------------------------------------
def _attn_flash_kernel(*refs, n_head, d_k, d_v, len_k, kv_tile, apply_mask):
    i = 0
    mb_ref = None
    if apply_mask:
        mb_ref = refs[i]
        i += 1
    q_ref, k_ref, v_ref = refs[i:i + 3]
    i += 3
    o_ref = refs[i]
    i += 1
    m_sc, l_sc, acc_sc = refs[i:i + 3]

    kv = pl.program_id(2)

    @pl.when(kv == 0)
    def _():
        m_sc[...] = jnp.full_like(m_sc, -jnp.inf)
        l_sc[...] = jnp.zeros_like(l_sc)
        acc_sc[...] = jnp.zeros_like(acc_sc)

    q = q_ref[0]                                             # (TQ, H*dk) bf16
    k = k_ref[0]                                             # (TK, H*dk) bf16
    v = v_ref[0]                                             # (TK, H*dv) bf16
    mb = mb_ref[0].astype(jnp.float32) if apply_mask else None

    needs_edge_mask = (len_k % kv_tile) != 0
    if needs_edge_mask:
        key_idx = kv * kv_tile + jax.lax.broadcasted_iota(
            jnp.int32, (q.shape[0], kv_tile), 1)
        valid = key_idx < len_k

    for h in range(n_head):
        q_h = q[:, h * d_k:(h + 1) * d_k]
        k_h = k[:, h * d_k:(h + 1) * d_k]
        v_h = v[:, h * d_v:(h + 1) * d_v]
        s = jax.lax.dot_general(q_h, k_h, (((1,), (1,)), ((), ())),
                                preferred_element_type=jnp.float32)  # (TQ, TK)
        if apply_mask:
            s = s + mb
        if needs_edge_mask:
            s = jnp.where(valid, s, _MASK_VALUE)
        m_prev = m_sc[h]                                     # (TQ, 1)
        m_new = jnp.maximum(m_prev, jnp.max(s, axis=-1, keepdims=True))
        alpha = jnp.exp(m_prev - m_new)
        p = jnp.exp(s - m_new)
        l_sc[h] = alpha * l_sc[h] + jnp.sum(p, axis=-1, keepdims=True)
        acc_sc[h] = alpha * acc_sc[h] + jnp.dot(
            p.astype(_MXU_DTYPE), v_h, preferred_element_type=jnp.float32)
        m_sc[h] = m_new

    @pl.when(kv == pl.num_programs(2) - 1)
    def _():
        parts = [acc_sc[h] * pl.reciprocal(l_sc[h], approx=True)
                 for h in range(n_head)]
        o_ref[0] = jnp.concatenate(parts, axis=-1).astype(o_ref.dtype)


def attention_flash(q, k, v, mask_bias, n_head, d_k, d_v):
    sz_b, len_q, _ = q.shape
    _, len_k, _ = k.shape
    tq = _row_tile(len_q)
    tk = _kv_tile(len_k)
    grid = (sz_b, pl.cdiv(len_q, tq), pl.cdiv(len_k, tk))
    apply_mask = mask_bias is not None

    kernel = functools.partial(_attn_flash_kernel, n_head=n_head, d_k=d_k,
                               d_v=d_v, len_k=len_k, kv_tile=tk,
                               apply_mask=apply_mask)
    inputs, in_specs = [], []
    if apply_mask:
        inputs.append(mask_bias)
        in_specs.append(
            pl.BlockSpec((1, tq, tk), lambda b_, t, kv: (b_, t, kv)))
    inputs += [q, k, v]
    in_specs += [
        pl.BlockSpec((1, tq, n_head * d_k), lambda b_, t, kv: (b_, t, 0)),
        pl.BlockSpec((1, tk, n_head * d_k), lambda b_, t, kv: (b_, kv, 0)),
        pl.BlockSpec((1, tk, n_head * d_v), lambda b_, t, kv: (b_, kv, 0)),
    ]
    return pl.pallas_call(
        kernel,
        out_shape=jax.ShapeDtypeStruct((sz_b, len_q, n_head * d_v), _ACT_DTYPE),
        grid=grid,
        in_specs=in_specs,
        out_specs=pl.BlockSpec((1, tq, n_head * d_v),
                               lambda b_, t, kv: (b_, t, 0)),
        scratch_shapes=[
            pltpu.VMEM((n_head, tq, 1), jnp.float32),   # running max
            pltpu.VMEM((n_head, tq, 1), jnp.float32),   # running denominator
            pltpu.VMEM((n_head, tq, d_v), jnp.float32), # running context
        ],
        compiler_params=pltpu.CompilerParams(
            dimension_semantics=("parallel", "parallel", "arbitrary"),
            vmem_limit_bytes=_vmem_limit_bytes()),
    )(*inputs)


# ---------------------------------------------------------------------------
# Kernel 3: fc (head merge) + residual add + LayerNorm, one matmul per tile
# with contraction depth H*d_v (ctx is already lane-dense interleaved).
# ---------------------------------------------------------------------------
def _fc_ln_kernel(x_ref, w_ref, b_ref, res_ref, g_ref, beta_ref, o_ref, *,
                  ln_eps):
    x = x_ref[0].astype(_MXU_DTYPE)                          # (TQ, H*dv)
    y = jnp.dot(x, w_ref[...], preferred_element_type=jnp.float32)
    # TODO(synk): dropout before the residual add is identity (eval mode).
    y = y + b_ref[...] + res_ref[0].astype(jnp.float32)
    mean = jnp.mean(y, axis=-1, keepdims=True)
    var = jnp.mean(jnp.square(y - mean), axis=-1, keepdims=True)
    y = (y - mean) * jax.lax.rsqrt(var + ln_eps)
    o_ref[0] = (y * g_ref[...] + beta_ref[...]).astype(o_ref.dtype)


def fc_residual_layernorm(ctx, w, b, residual, gamma, beta, *, ln_eps=1e-5):
    sz_b, len_q, d_ctx = ctx.shape
    d_model = w.shape[-1]
    tq = _row_tile(len_q)
    grid = (sz_b, pl.cdiv(len_q, tq))
    kernel = functools.partial(_fc_ln_kernel, ln_eps=ln_eps)
    return pl.pallas_call(
        kernel,
        out_shape=jax.ShapeDtypeStruct((sz_b, len_q, d_model), jnp.float32),
        grid=grid,
        in_specs=[
            pl.BlockSpec((1, tq, d_ctx), lambda b_, t: (b_, t, 0)),
            pl.BlockSpec((d_ctx, d_model), lambda b_, t: (0, 0)),
            pl.BlockSpec((1, d_model), lambda b_, t: (0, 0)),
            pl.BlockSpec((1, tq, d_model), lambda b_, t: (b_, t, 0)),
            pl.BlockSpec((1, d_model), lambda b_, t: (0, 0)),
            pl.BlockSpec((1, d_model), lambda b_, t: (0, 0)),
        ],
        out_specs=pl.BlockSpec((1, tq, d_model), lambda b_, t: (b_, t, 0)),
        compiler_params=pltpu.CompilerParams(
            dimension_semantics=("parallel", "parallel"),
            vmem_limit_bytes=_vmem_limit_bytes()),
    )(ctx, w, b, residual, gamma, beta)


# ---------------------------------------------------------------------------
# Module wrapper
# ---------------------------------------------------------------------------
class MultiHeadAttentionPallas:
    def __init__(self, n_head, d_model, d_k, d_v, addition_input=0, key=None):
        self.n_head = n_head
        self.d_model = d_model
        self.d_k = d_k
        self.d_v = d_v
        key = jax.random.PRNGKey(0) if key is None else key
        ks = jax.random.split(key, 8)
        d_kv_in = d_model + addition_input
        inv_temp = 1.0 / (float(d_k) ** 0.5)

        def normal(kk, shape, std):
            return std * jax.random.normal(kk, shape, jnp.float32)

        # PyTorch Linear weight is (out, in); store transposed (in, out) bf16,
        # head-major chunks along the out axis (matches torch .view head split).
        w_qs = normal(ks[0], (n_head * d_k, d_model),
                      (2.0 / (d_model + d_k)) ** 0.5)
        w_ks = normal(ks[1], (n_head * d_k, d_kv_in),
                      (2.0 / (d_kv_in + d_k)) ** 0.5)
        w_vs = normal(ks[2], (n_head * d_v, d_kv_in),
                      (2.0 / (d_kv_in + d_v)) ** 0.5)
        # 1/temperature folded into the Q projection (weights AND bias).
        self.w_qs_w = (w_qs.T * inv_temp).astype(_MXU_DTYPE)
        self.w_ks_w = w_ks.T.astype(_MXU_DTYPE)
        self.w_vs_w = w_vs.T.astype(_MXU_DTYPE)
        self.w_qs_b = (normal(ks[3], (1, n_head * d_k), 0.02)
                       * inv_temp).astype(_MXU_DTYPE)
        self.w_ks_b = normal(ks[4], (1, n_head * d_k), 0.02).astype(_MXU_DTYPE)
        self.w_vs_b = normal(ks[5], (1, n_head * d_v), 0.02).astype(_MXU_DTYPE)
        # fc: xavier_normal, stored transposed (H*d_v, d_model) bf16.
        fc_std = (2.0 / (n_head * d_v + d_model)) ** 0.5
        fc_w = normal(ks[6], (d_model, n_head * d_v), fc_std)
        self.fc_w = fc_w.T.astype(_MXU_DTYPE)
        self.fc_b = normal(ks[7], (1, d_model), 0.02).astype(jnp.float32)
        # LayerNorm params (PyTorch default init)
        self.ln_gamma = jnp.ones((1, d_model), jnp.float32)
        self.ln_beta = jnp.zeros((1, d_model), jnp.float32)

    def __call__(self, q, k, v, mask=None, return_attn=True):
        sz_b, len_q, _ = q.shape
        _, len_k, _ = k.shape
        residual = q

        # Fused-head projections: lane-dense (B, L, H*d) outputs.
        qp = fused_head_projection(q, self.w_qs_w, self.w_qs_b)
        kp = fused_head_projection(k, self.w_ks_w, self.w_ks_b)
        vp = fused_head_projection(v, self.w_vs_w, self.w_vs_b)

        mask_bias = None
        if mask is not None:
            # Additive bias (one VPU add in-kernel) in bf16.
            mask_bias = jnp.where(mask != 0, jnp.float32(_MASK_VALUE),
                                  jnp.float32(0.0)).astype(_MXU_DTYPE)

        if return_attn:
            ctx, attn = attention_with_probs(
                qp, kp, vp, mask_bias, self.n_head, self.d_k, self.d_v)
        else:
            ctx = attention_flash(
                qp, kp, vp, mask_bias, self.n_head, self.d_k, self.d_v)
            attn = None

        out = fc_residual_layernorm(
            ctx, self.fc_w, self.fc_b, residual, self.ln_gamma, self.ln_beta)

        if attn is not None:
            # (H, B, Lq, Lk) -> (H*B, Lq, Lk): contiguous, metadata-only
            # reshape (matches PyTorch's mask.repeat(n_head, ...) ordering).
            attn = attn.reshape(self.n_head * sz_b, len_q, len_k)
        return out, attn


if __name__ == "__main__":
    n_head, d_model, d_k, d_v = 2, 32, 16, 16
    sz_b, seq_len = 2, 8

    key = jax.random.PRNGKey(0)
    kq, kk, kv, kparams = jax.random.split(key, 4)
    q = jax.random.normal(kq, (sz_b, seq_len, d_model), jnp.float32)
    k = jax.random.normal(kk, (sz_b, seq_len, d_model), jnp.float32)
    v = jax.random.normal(kv, (sz_b, seq_len, d_model), jnp.float32)

    mha = MultiHeadAttentionPallas(n_head, d_model, d_k, d_v, key=kparams)

    # Path 1: no mask, attention probabilities returned (single-K-pass kernel).
    out, attn = mha(q, k, v, mask=None, return_attn=True)
    out = jax.block_until_ready(out)
    attn = jax.block_until_ready(attn)
    assert out.shape == (sz_b, seq_len, d_model)
    assert attn.shape == (n_head * sz_b, seq_len, seq_len)
    assert bool(jnp.all(jnp.isfinite(out)))
    row_sums = jnp.sum(attn.astype(jnp.float32), axis=-1)
    assert bool(jnp.all(jnp.abs(row_sums - 1.0) < 2e-2))

    # Path 2: masked attention (last two key positions masked out everywhere).
    mask = jnp.broadcast_to(
        (jnp.arange(seq_len) >= seq_len - 2)[None, None, :],
        (sz_b, seq_len, seq_len))
    out_m, attn_m = mha(q, k, v, mask=mask, return_attn=True)
    out_m = jax.block_until_ready(out_m)
    attn_m = jax.block_until_ready(attn_m)
    assert bool(jnp.all(jnp.isfinite(out_m)))
    assert bool(jnp.all(attn_m.astype(jnp.float32)[:, :, seq_len - 2:] < 1e-6))

    # Path 3: flash (K-tiled) variant, no probability output; matches path 1.
    out_f, attn_f = mha(q, k, v, mask=None, return_attn=False)
    out_f = jax.block_until_ready(out_f)
    assert attn_f is None
    assert bool(jnp.all(jnp.isfinite(out_f)))
    assert bool(jnp.max(jnp.abs(out_f - out)) < 1e-1)

    # Path 4: flash variant with mask; matches path 2.
    out_fm, _ = mha(q, k, v, mask=mask, return_attn=False)
    out_fm = jax.block_until_ready(out_fm)
    assert bool(jnp.max(jnp.abs(out_fm - out_m)) < 1e-1)

    print("KERNEL_OK")
</pallas_src>

<mosaic_0001>
module attributes {stable_mosaic.version = 11 : i64} {
  func.func @_proj_kernel(%arg0: i32, %arg1: i32, %arg2: memref<1x8x32xf32, #tpu.memory_space<vmem>>, %arg3: memref<32x32xbf16, #tpu.memory_space<vmem>>, %arg4: memref<1x32xbf16, #tpu.memory_space<vmem>>, %arg5: memref<1x8x32xbf16, #tpu.memory_space<vmem>>) attributes {dimension_semantics = [#tpu.dimension_semantics<parallel>, #tpu.dimension_semantics<parallel>], iteration_bounds = array<i64: 2, 1>, scalar_prefetch = 0 : i64, scratch_operands = 0 : i64, tpu.core_type = #tpu.core_type<tc>, window_params = [{transform_indices = @transform_0, window_bounds = array<i64: 1, 8, 32>}, {pipeline_mode = #tpu.pipeline_mode<synchronous>, transform_indices = @transform_1, window_bounds = array<i64: 32, 32>}, {pipeline_mode = #tpu.pipeline_mode<synchronous>, transform_indices = @transform_2, window_bounds = array<i64: 1, 32>}, {transform_indices = @transform_3, window_bounds = array<i64: 1, 8, 32>}]} {
    %c0 = arith.constant 0 : index
    %c0_0 = arith.constant 0 : index
    %c0_1 = arith.constant 0 : index
    %0 = vector.load %arg2[%c0, %c0_0, %c0_1] : memref<1x8x32xf32, #tpu.memory_space<vmem>>, vector<1x8x32xf32>
    %1 = vector.shape_cast %0 : vector<1x8x32xf32> to vector<8x32xf32>
    %2 = arith.truncf %1 : vector<8x32xf32> to vector<8x32xbf16>
    %c0_2 = arith.constant 0 : index
    %c0_3 = arith.constant 0 : index
    %3 = vector.load %arg3[%c0_2, %c0_3] : memref<32x32xbf16, #tpu.memory_space<vmem>>, vector<32x32xbf16>
    %cst = arith.constant dense<0.000000e+00> : vector<8x32xf32>
    %4 = tpu.matmul %2, %3, %cst {dimension_numbers = #tpu.dot_dimension_numbers<[1], [0], [0], [1], [0, 0, 1, 1], [], []>} : vector<8x32xbf16>, vector<32x32xbf16>, vector<8x32xf32> -> vector<8x32xf32>
    %c0_4 = arith.constant 0 : index
    %c0_5 = arith.constant 0 : index
    %5 = vector.load %arg4[%c0_4, %c0_5] : memref<1x32xbf16, #tpu.memory_space<vmem>>, vector<1x32xbf16>
    %6 = arith.extf %5 : vector<1x32xbf16> to vector<1x32xf32>
    %7 = vector.broadcast %6 : vector<1x32xf32> to vector<8x32xf32>
    %8 = arith.addf %4, %7 : vector<8x32xf32>
    %9 = arith.truncf %8 : vector<8x32xf32> to vector<8x32xbf16>
    %c0_6 = arith.constant 0 : index
    %c0_7 = arith.constant 0 : index
    %c0_8 = arith.constant 0 : index
    %10 = vector.load %arg5[%c0_6, %c0_7, %c0_8] : memref<1x8x32xbf16, #tpu.memory_space<vmem>>, vector<1x8x32xbf16>
    %11 = vector.shape_cast %10 : vector<1x8x32xbf16> to vector<8x32xbf16>
    %12 = vector.shape_cast %9 : vector<8x32xbf16> to vector<1x8x32xbf16>
    tpu.vector_store %arg5[%c0_6, %c0_7, %c0_8], %12 {strides = array<i32>} : memref<1x8x32xbf16, #tpu.memory_space<vmem>>, vector<1x8x32xbf16>,
    return
  }
  func.func @transform_0(%arg0: i32, %arg1: i32) -> (i32, i32, i32) {
    %c0_i32 = arith.constant 0 : i32
    %c0_i32_0 = arith.constant 0 : i32
    return %arg0, %arg1, %c0_i32 : i32, i32, i32
  }
  func.func @transform_1(%arg0: i32, %arg1: i32) -> (i32, i32) {
    %c0_i32 = arith.constant 0 : i32
    %c0_i32_0 = arith.constant 0 : i32
    %c0_i32_1 = arith.constant 0 : i32
    return %c0_i32, %c0_i32_0 : i32, i32
  }
  func.func @transform_2(%arg0: i32, %arg1: i32) -> (i32, i32) {
    %c0_i32 = arith.constant 0 : i32
    %c0_i32_0 = arith.constant 0 : i32
    %c0_i32_1 = arith.constant 0 : i32
    return %c0_i32, %c0_i32_0 : i32, i32
  }
  func.func @transform_3(%arg0: i32, %arg1: i32) -> (i32, i32, i32) {
    %c0_i32 = arith.constant 0 : i32
    %c0_i32_0 = arith.constant 0 : i32
    return %arg0, %arg1, %c0_i32 : i32, i32, i32
  }
}

</mosaic_0001>

<llo_original>
// kernel: tpu_custom_call.1
$region0: #{tpu_custom_call.1}
  #allocation0 [shape = 'u32[]', space=smem, size = 0x4, offset = 0x4, fixed_abs, tag = 'smem constant byte address 0x4 - core index']
  #allocation1 [shape = 'u32[144,128]{1,0:T(1,128)}', space=vmem, size = 0x12000, scoped, tag = 'internal scratch']
  %s0 = inlined_call_operand.hbm [shape: f32[2,8,32], index: 0, kind: input, shape index: {}]
  %s1 = inlined_call_operand.hbm [shape: bf16[32,32], index: 1, kind: input, shape index: {}]
  %s2 = inlined_call_operand.hbm [shape: bf16[1,32], index: 2, kind: input, shape index: {}]
  %s3 = inlined_call_operand.hbm [shape: bf16[2,8,32], index: 3, kind: output, shape index: {}]
  %s4 = sld [smem:[#allocation0]]
  $region57: #{tpu_custom_call.1} parent=0
    _
  %s6 = ssub.s32 1, %s4
  %s7 = scalar_select 0, %s6, %s4
  $region1: #{tpu_custom_call.1} parent=0
    #allocation2 [shape = 'u8[8192]{0}', space=vmem, size = 0x2000, scoped, tag = 'input window, operand 0']
    #allocation3 [shape = 's32[2]{0}', space=sflag, size = 0x8, scoped, tag = 'scoped memory for tpu_custom_call.1']
    #allocation4 [shape = 's32[2]{0}', space=sflag, size = 0x8, scoped, tag = 'scoped memory for tpu_custom_call.1']
    #allocation5 [shape = 'u8[8192]{0}', space=vmem, size = 0x2000, scoped, tag = 'input window, operand 1, single buffered']
    #allocation6 [shape = 's32[1]{0}', space=sflag, size = 0x4, scoped, tag = 'scoped memory for tpu_custom_call.1']
    #allocation7 [shape = 'u8[512]{0}', space=vmem, size = 0x400, scoped, tag = 'input window, operand 2, single buffered']
    #allocation8 [shape = 'u8[4096]{0}', space=vmem, size = 0x1000, scoped, tag = 'output window, operand 0']
    %8 = vsyncpa [#allocation3], 0
    %s9 = scalar_lea.sflag [#allocation3], 1
    %10 = vsyncpa %s9, 0
    %11 = vsyncpa [#allocation6], 0
    %12 = vsyncpa [#allocation4], 0
    %s13 = scalar_lea.sflag [#allocation4], 1
    %14 = vsyncpa %s13, 0
    loop: start=0, step=1, limit=4
    $region2: #{tpu_custom_call.1} parent=1 // loop_pre_header
      _
    $region3: #{tpu_custom_call.1} parent=1 // loop_header
      %s16 = sphi 0, %s20
      %p17 = scmp.ge.s32.totalorder %s16, 4
      %s23 = sphi 0, %s35
      %s24 = sphi 0, %s31
      %s25 = sphi 0, %s23
      %s26 = sphi 0, %s24
      %s27 = sphi 0, %s25
      %s28 = sphi 0, %s26
      %s40 = sphi 0, %s42
      %s43 = sphi 0, %s40
      %s44 = sphi 0, %s43
      %s60 = sphi 0, %s44
      %s64 = sphi 0, %s64
      %s66 = sphi 0, %s64
      %s67 = sphi 0, %s66
      %s81 = sphi 0, %s67
      %s85 = sphi 0, %s85
      %s87 = sphi 0, %s85
      %s88 = sphi 0, %s87
      %s102 = sphi 0, %s88
      %s110 = sphi 0, %s112
      %s113 = sphi 0, %s110
      %s114 = sphi 0, %s113
      %s130 = sphi 0, %s114
    $region4: #{tpu_custom_call.1} parent=1 // loop_header_branch
      %19 = sbr.rel (%p17) target = $region8
    $region5: #{tpu_custom_call.1} parent=1 // loop_body
      %s21 = ssub.s32 %s16, 1
      %s22 = ssub.s32 %s16, 2
      %s29 = sadd.s32 1, %s24
      %p30 = scmp.ge.s32.totalorder %s29, 1
      %s31 = scalar_select %p30, 0, %s29
      %s32 = sadd.s32 1, %s23
      %s33 = scalar_select %p30, %s32, %s23
      %p34 = scmp.ge.s32.totalorder %s33, 2
      %s35 = scalar_select %p34, 0, %s33
      %s36 = ssub.s32 %s23, %s35
      %s37 = ssub.s32 %s24, %s31
      %s38 = sor.u32 %s36, %s37
      %p39 = scmp.eq.s32.totalorder %s38, 0
      %s41 = sadd.s32 %s40, 1
      %s42 = scalar_select %p39, %s40, %s41
      %p45 = pneg %p39
      %p46 = scmp.eq.s32.totalorder %s16, 1
      %p47 = por %p45, %p46
      %p48 = scmp.ne.s32.totalorder %s40, %s43
      %p49 = scmp.eq.s32.totalorder %s16, 0
      %p50 = por %p48, %p49
      %p51 = scmp.ne.s32.totalorder %s40, %s43
      %p52 = scmp.eq.s32.totalorder %s21, 1
      %p53 = por %p51, %p52
      %p54 = scmp.ne.s32.totalorder %s43, %s44
      %p55 = scmp.eq.s32.totalorder %s21, 0
      %p56 = por %p54, %p55
      %p57 = scmp.ne.s32.totalorder %s43, %s44
      %p58 = scmp.eq.s32.totalorder %s22, 1
      %p59 = por %p57, %p58
      %p61 = scmp.ne.s32.totalorder %s44, %s60
      %p62 = scmp.eq.s32.totalorder %s22, 0
      %p63 = por %p61, %p62
      %s65 = sadd.s32 %s64, 1
      %p68 = scmp.eq.s32.totalorder %s16, 1
      %p69 = scmp.ne.s32.totalorder %s64, %s66
      %p70 = scmp.eq.s32.totalorder %s16, 0
      %p71 = por %p69, %p70
      %p72 = scmp.ne.s32.totalorder %s64, %s66
      %p73 = scmp.eq.s32.totalorder %s21, 1
      %p74 = por %p72, %p73
      %p75 = scmp.ne.s32.totalorder %s66, %s67
      %p76 = scmp.eq.s32.totalorder %s21, 0
      %p77 = por %p75, %p76
      %p78 = scmp.ne.s32.totalorder %s66, %s67
      %p79 = scmp.eq.s32.totalorder %s22, 1
      %p80 = por %p78, %p79
      %p82 = scmp.ne.s32.totalorder %s67, %s81
      %p83 = scmp.eq.s32.totalorder %s22, 0
      %p84 = por %p82, %p83
      %s86 = sadd.s32 %s85, 1
      %p89 = scmp.eq.s32.totalorder %s16, 1
      %p90 = scmp.ne.s32.totalorder %s85, %s87
      %p91 = scmp.eq.s32.totalorder %s16, 0
      %p92 = por %p90, %p91
      %p93 = scmp.ne.s32.totalorder %s85, %s87
      %p94 = scmp.eq.s32.totalorder %s21, 1
      %p95 = por %p93, %p94
      %p96 = scmp.ne.s32.totalorder %s87, %s88
      %p97 = scmp.eq.s32.totalorder %s21, 0
      %p98 = por %p96, %p97
      %p99 = scmp.ne.s32.totalorder %s87, %s88
      %p100 = scmp.eq.s32.totalorder %s22, 1
      %p101 = por %p99, %p100
      %p103 = scmp.ne.s32.totalorder %s88, %s102
      %p104 = scmp.eq.s32.totalorder %s22, 0
      %p105 = por %p103, %p104
      %s106 = ssub.s32 %s23, %s35
      %s107 = ssub.s32 %s24, %s31
      %s108 = sor.u32 %s106, %s107
      %p109 = scmp.eq.s32.totalorder %s108, 0
      %s111 = sadd.s32 %s110, 1
      %s112 = scalar_select %p109, %s110, %s111
      %p115 = pneg %p109
      %p116 = scmp.eq.s32.totalorder %s16, 1
      %p117 = por %p115, %p116
      %p118 = scmp.ne.s32.totalorder %s110, %s113
      %p119 = scmp.eq.s32.totalorder %s16, 0
      %p120 = por %p118, %p119
      %p121 = scmp.ne.s32.totalorder %s110, %s113
      %p122 = scmp.eq.s32.totalorder %s21, 1
      %p123 = por %p121, %p122
      %p124 = scmp.ne.s32.totalorder %s113, %s114
      %p125 = scmp.eq.s32.totalorder %s21, 0
      %p126 = por %p124, %p125
      %p127 = scmp.ne.s32.totalorder %s113, %s114
      %p128 = scmp.eq.s32.totalorder %s22, 1
      %p129 = por %p127, %p128
      %p131 = scmp.ne.s32.totalorder %s114, %s130
      %p132 = scmp.eq.s32.totalorder %s22, 0
      %p133 = por %p131, %p132
      %p134 = scmp.le.s32.totalorder 1, %s16
      %p135 = scmp.lt.s32.totalorder %s16, 3
      %p136 = pnand %p134, %p135
      %p137 = pneg %p136
      // Predicated region
      $region9: #{tpu_custom_call.1} parent=5 // pred_check
        _
      $region10: #{tpu_custom_call.1} parent=5 // pred_check_branch
        %139 = sbr.rel (%p136) target = $region12
      $region11: #{tpu_custom_call.1} parent=5 // pred_region
        %s140 = ssub.s32 %s16, 1
        // Predicated region
        $region13: #{tpu_custom_call.1} parent=11 // pred_check
          %p141 = pneg %p77
        $region14: #{tpu_custom_call.1} parent=11 // pred_check_branch
          %143 = sbr.rel (%p141) target = $region16
        $region15: #{tpu_custom_call.1} parent=11 // pred_region
          %s145 = ssub.s32 256, 256
          %146 = vsyncadd [#allocation6], %s145
          %s147 = sshll.u32 [#allocation5], 4
          %s148 = int_to_ptr.vmem [resolvable:$true] %s147
          %153 = dma.hbm_to_vmem [thread:$0]  %s1, 256, %s148, [#allocation6], 64, 64, 4
        $region16: #{tpu_custom_call.1} parent=11 // pred_fallthru
          _
        // Predicated region
        $region17: #{tpu_custom_call.1} parent=11 // pred_check
          %p154 = pneg %p98
        $region18: #{tpu_custom_call.1} parent=11 // pred_check_branch
          %156 = sbr.rel (%p154) target = $region20
        $region19: #{tpu_custom_call.1} parent=11 // pred_region
          %s158 = ssub.s32 16, 16
          %159 = vsyncadd [#allocation6], %s158
          %s161 = sshll.u32 [#allocation7], 4
          %s162 = int_to_ptr.vmem [resolvable:$true] %s161
          %164 = dma.hbm_to_vmem [thread:$0]  %s2, 16, %s162, [#allocation6]
        $region20: #{tpu_custom_call.1} parent=11 // pred_fallthru
          _
      $region12: #{tpu_custom_call.1} parent=5 // pred_fallthru
        _
      %p165 = scmp.lt.s32.totalorder %s16, 2
      // Predicated region
      $region21: #{tpu_custom_call.1} parent=5 // pred_check
        %p166 = pneg %p165
      $region22: #{tpu_custom_call.1} parent=5 // pred_check_branch
        %168 = sbr.rel (%p166) target = $region24
      $region23: #{tpu_custom_call.1} parent=5 // pred_region
        // Predicated region
        $region25: #{tpu_custom_call.1} parent=23 // pred_check
          %p169 = pneg %p50
        $region26: #{tpu_custom_call.1} parent=23 // pred_check_branch
          %171 = sbr.rel (%p169) target = $region28
        $region27: #{tpu_custom_call.1} parent=23 // pred_region
          %s172 = sand.u32 %s40, 1
          %s173 = scalar_lea.sflag [#allocation3], %s172
          %s174 = sand.u32 %s40, 1
          %s175 = smul.addr %s174, 8
          %s176 = scalar_lea.vmem [#allocation2], %s175
          %s178 = ssub.s32 128, 128
          %179 = vsyncadd %s173, %s178
          %s180 = sadd.s32 %s24, %s23
          %s181 = smul.addr %s180, 128
          %s182 = scalar_lea.hbm %s0, %s181
          %s184 = sshll.u32 %s176, 4
          %s185 = int_to_ptr.vmem [resolvable:$true] %s184
          %187 = dma.hbm_to_vmem [thread:$0]  %s182, 128, %s185, %s173
        $region28: #{tpu_custom_call.1} parent=23 // pred_fallthru
          _
      $region24: #{tpu_custom_call.1} parent=5 // pred_fallthru
        _
      %p188 = scmp.le.s32.totalorder 1, %s16
      %p189 = scmp.lt.s32.totalorder %s16, 3
      %p190 = pnand %p188, %p189
      %p191 = pneg %p190
      // Predicated region
      $region29: #{tpu_custom_call.1} parent=5 // pred_check
        _
      $region30: #{tpu_custom_call.1} parent=5 // pred_check_branch
        %193 = sbr.rel (%p190) target = $region32
      $region31: #{tpu_custom_call.1} parent=5 // pred_region
        %s194 = ssub.s32 %s16, 1
        %s195 = sand.u32 %s43, 1
        %s196 = scalar_lea.sflag [#allocation3], %s195
        %s197 = sand.u32 %s43, 1
        %s198 = smul.addr %s197, 8
        %s199 = scalar_lea.vmem [#allocation2], %s198
        // Predicated region
        $region33: #{tpu_custom_call.1} parent=31 // pred_check
          %p200 = pneg %p56
        $region34: #{tpu_custom_call.1} parent=31 // pred_check_branch
          %202 = sbr.rel (%p200) target = $region36
        $region35: #{tpu_custom_call.1} parent=31 // pred_region
          %203 = dma.done %s196, 128
        $region36: #{tpu_custom_call.1} parent=31 // pred_fallthru
          _
        // Predicated region
        $region37: #{tpu_custom_call.1} parent=31 // pred_check
          %p204 = pneg %p77
        $region38: #{tpu_custom_call.1} parent=31 // pred_check_branch
          %206 = sbr.rel (%p204) target = $region40
        $region39: #{tpu_custom_call.1} parent=31 // pred_region
          %207 = dma.done [#allocation6], 256
        $region40: #{tpu_custom_call.1} parent=31 // pred_fallthru
          _
        // Predicated region
        $region41: #{tpu_custom_call.1} parent=31 // pred_check
          %p208 = pneg %p98
        $region42: #{tpu_custom_call.1} parent=31 // pred_check_branch
          %210 = sbr.rel (%p208) target = $region44
        $region43: #{tpu_custom_call.1} parent=31 // pred_region
          %211 = dma.done [#allocation6], 16
        $region44: #{tpu_custom_call.1} parent=31 // pred_fallthru
          _
        %s212 = sand.u32 %s43, 1
        %s213 = scalar_lea.sflag [#allocation3], %s212
        %s214 = sand.u32 %s43, 1
        %s215 = smul.addr %s214, 8
        %s216 = scalar_lea.vmem [#allocation2], %s215
        %p217 = pneg %p56
        %p218 = pneg %p53
        %p219 = pneg %p77
        %p220 = pneg %p74
        %p221 = pneg %p98
        %p222 = pneg %p95
        %p223 = pneg %p126
        %p224 = pneg %p123
        %s225 = sand.u32 %s113, 1
        %s226 = scalar_lea.sflag [#allocation4], %s225
        %s227 = sand.u32 %s113, 1
        %s228 = smul.addr %s227, 4
        %s229 = scalar_lea.vmem [#allocation8], %s228
        %v231 = vld [vmem:[%s199] sm:$0xff]
        %v232 = vpack.c.bf16 %v231, %v231
        %v233 = vld [vmem:[#allocation5] sm:$0xf]
        %v234 = vld [vmem:[#allocation5 + $0x4] sm:$0xf]
        %v235 = vld [vmem:[#allocation5 + $0x8] sm:$0xf]
        %v236 = vld [vmem:[#allocation5 + $0xc] sm:$0xf]
        %v237 = vld [vmem:[#allocation7] sm:$0x1]
        %v238 = vunpack.c.l.bf16 %v237
        %v239 = vlaneseq
        %v240 = vshrl.u32 %v239, 7
        %v241 = vsub.s32 0, %v240
        %v242 = vrot.slane %v238, %v241
        %v247 = vunpack.c.l.b16 %v233
        %v248 = vunpack.c.l.b16 %v234
        %v249 = vunpack.c.l.b16 %v235
        %v250 = vunpack.c.l.b16 %v236
        %v251 = vpack.c.b16 %v248, %v247
        %v252 = vpack.c.b16 %v250, %v249
        %vm255 = vcmask 261120
        %v257 = vsel %vm255, %v232, 0
        %259 = vmatprep.subr.bf16.mxu0 0
        %260 = vmatpush1.bf16.msra.mxu0 %v251
        %261 = vmatprep.subr.bf16.mxu0 0
        %262 = vmatpush1.bf16.msra.mxu0 %v252
        %263 = vmatprep.subr.bf16.mxu0 0
        %264 = vmatpush1.bf16.msra.mxu0 0
        %265 = vmatprep.subr.bf16.mxu0 0
        %266 = vmatpush1.bf16.msra.mxu0 0
        %267 = vmatprep.subr.bf16.mxu0 0
        %268 = vmatpush1.bf16.msra.mxu0 0
        %269 = vmatprep.subr.bf16.mxu0 0
        %270 = vmatpush1.bf16.msra.mxu0 0
        %271 = vmatprep.subr.bf16.mxu0 0
        %272 = vmatpush1.bf16.msra.mxu0 0
        %273 = vmatprep.subr.bf16.mxu0 0
        %274 = vmatpush1.bf16.msra.mxu0 0
        %275 = vmatprep.subr.bf16.mxu0 0
        %276 = vmatpush1.bf16.msra.mxu0 0
        %277 = vmatprep.subr.bf16.mxu0 0
        %278 = vmatpush1.bf16.msra.mxu0 0
        %279 = vmatprep.subr.bf16.mxu0 0
        %280 = vmatpush1.bf16.msra.mxu0 0
        %281 = vmatprep.subr.bf16.mxu0 0
        %282 = vmatpush1.bf16.msra.mxu0 0
        %283 = vmatprep.subr.bf16.mxu0 0
        %284 = vmatpush1.bf16.msra.mxu0 0
        %285 = vmatprep.subr.bf16.mxu0 0
        %286 = vmatpush1.bf16.msra.mxu0 0
        %287 = vmatprep.subr.bf16.mxu0 0
        %288 = vmatpush1.bf16.msra.mxu0 0
        %289 = vmatprep.subr.bf16.mxu0 0
        %290 = vmatpush1.bf16.msra.mxu0 0
        %291 = vmatprep.mubr.bf16.mxu0 0
        %292 = vmatmul.mubr.bf16.gmra.mrb[0].mxu0 %v257
        %v293 = vpop.f32.mrb[0].mxu0
        %v294 = vadd.f32 %v242, %v293
        %v295 = vpop.f32.mrb[0].mxu0
        %v296 = vpop.f32.mrb[0].mxu0
        %v297 = vpop.f32.mrb[0].mxu0
        %298 = vdwg.mxu0
        %v299 = vpack.c.bf16 %v294, %v294
        %vm300 = vcmask 257024
        %301 = vst.msk [vmem:[%s229] sm:$0xf] %vm300, %v299
        %s302 = sand.u32 %s113, 1
        %s303 = scalar_lea.sflag [#allocation4], %s302
        %s304 = sand.u32 %s113, 1
        %s305 = smul.addr %s304, 4
        %s306 = scalar_lea.vmem [#allocation8], %s305
        // Predicated region
        $region45: #{tpu_custom_call.1} parent=31 // pred_check
          %p307 = pneg %p123
        $region46: #{tpu_custom_call.1} parent=31 // pred_check_branch
          %309 = sbr.rel (%p307) target = $region48
        $region47: #{tpu_custom_call.1} parent=31 // pred_region
          %s311 = ssub.s32 64, 64
          %312 = vsyncadd %s303, %s311
          %s313 = sadd.s32 %s26, %s25
          %s314 = smul.addr %s313, 64
          %s315 = scalar_lea.hbm %s3, %s314
          %s317 = sshll.u32 %s306, 4
          %s318 = int_to_ptr.vmem [resolvable:$true] %s317
          %320 = dma.vmem_to_hbm [thread:$0]  %s318, 64, %s315, %s303
        $region48: #{tpu_custom_call.1} parent=31 // pred_fallthru
          _
      $region32: #{tpu_custom_call.1} parent=5 // pred_fallthru
        _
      %p321 = scmp.le.s32.totalorder 2, %s16
      // Predicated region
      $region49: #{tpu_custom_call.1} parent=5 // pred_check
        %p322 = pneg %p321
      $region50: #{tpu_custom_call.1} parent=5 // pred_check_branch
        %324 = sbr.rel (%p322) target = $region52
      $region51: #{tpu_custom_call.1} parent=5 // pred_region
        %s325 = ssub.s32 %s16, 2
        // Predicated region
        $region53: #{tpu_custom_call.1} parent=51 // pred_check
          %p326 = pneg %p129
        $region54: #{tpu_custom_call.1} parent=51 // pred_check_branch
          %328 = sbr.rel (%p326) target = $region56
        $region55: #{tpu_custom_call.1} parent=51 // pred_region
          %s329 = sand.u32 %s114, 1
          %s330 = scalar_lea.sflag [#allocation4], %s329
          %s331 = sand.u32 %s114, 1
          %s332 = smul.addr %s331, 4
          %s333 = scalar_lea.vmem [#allocation8], %s332
          %334 = dma.done %s330, 64
        $region56: #{tpu_custom_call.1} parent=51 // pred_fallthru
          _
      $region52: #{tpu_custom_call.1} parent=5 // pred_fallthru
        _
    $region6: #{tpu_custom_call.1} parent=1 // loop_footer
      %s20 = sadd.s32 1, %s16
    $region7: #{tpu_custom_call.1} parent=1 // loop_footer_branch
      %15 = sbr.rel target = $region3
    $region8: #{tpu_custom_call.1} parent=1 // loop_exit
      _
    %335 = vsyncpa [#allocation3], 1
    %s336 = scalar_lea.sflag [#allocation3], 1
    %337 = vsyncpa %s336, 1
    %338 = vsyncpa [#allocation6], 1
    %339 = vsyncpa [#allocation4], 1
    %s340 = scalar_lea.sflag [#allocation4], 1
    %341 = vsyncpa %s340, 1

</llo_original>
